<compile_context>
chip_gen: v7x
topology: tpu7x:2x2x1
jax: 0.10.0
libtpu: 0.0.40
codegen_flags: <defaults>
</compile_context>

<pallas_src>
import functools
import math

import jax
import jax.numpy as jnp
from jax.experimental import pallas as pl
from jax.experimental.pallas import tpu as pltpu

_LANE = 128
_ROW_TILE_QUANTUM = 1024            # keeps (tile_n//128, 128) output blocks (8,128)-aligned
_MAX_BLOCK_BYTES = 4 * 1024 * 1024  # input tile size ~ HBM roofline plateau, v7x-safe
_VMEM_LIMIT = 48 * 1024 * 1024      # < v7x 64 MiB physical; plenty of headroom on v5e/v6e
_INV_LN2 = 1.0 / math.log(2.0)


# ----------------------------------------------------------------------------
# Small problems: single block, no pipelining needed.
# ----------------------------------------------------------------------------
def _small_kernel(x_ref, o_ref, *, apply_softmax):
    x = x_ref[...].astype(jnp.float32)
    if apply_softmax:
        # H = log(z) - sum(e*s)/z  with s = x - max, e = exp(s), z = sum(e)
        m = jnp.max(x, axis=1, keepdims=True)
        s = x - m
        e = jnp.exp(s)
        z = jnp.sum(e, axis=1, keepdims=True)
        se = jnp.sum(e * s, axis=1, keepdims=True)
        ent = jnp.log(z) - se * pl.reciprocal(z, approx=True)
    else:
        # Note: x == 0 gives 0*log(0) = NaN, matching the PyTorch reference.
        ent = jnp.sum(x * jnp.log(x), axis=1, keepdims=True) * (-_INV_LN2)
    o_ref[...] = ent.astype(o_ref.dtype)


def _entropy_small(x, apply_softmax):
    N, _ = x.shape
    out = pl.pallas_call(
        functools.partial(_small_kernel, apply_softmax=apply_softmax),
        out_shape=jax.ShapeDtypeStruct((N, 1), x.dtype),
    )(x)
    return out[:, 0]


# ----------------------------------------------------------------------------
# Main path: row-tiled, lane-dense output, parallel 1-D grid.
# ----------------------------------------------------------------------------
def _row_tiled_kernel(x_ref, o_ref, *, apply_softmax):
    # x_ref: (tile_n, C);  o_ref: (tile_n // 128, 128) lane-dense entropy slab.
    x = x_ref[...].astype(jnp.float32)
    if apply_softmax:
        m = jnp.max(x, axis=1, keepdims=True)
        s = x - m
        e = jnp.exp(s)
        z = jnp.sum(e, axis=1, keepdims=True)
        se = jnp.sum(e * s, axis=1, keepdims=True)
        # Relayout per-row scalars to lane-dense BEFORE the epilogue so the
        # log / reciprocal / subtract run on full vregs and the store is an
        # unmasked dense vst (biggest single lever per the perf review).
        z = z.reshape(o_ref.shape)
        se = se.reshape(o_ref.shape)
        ent = jnp.log(z) - se * pl.reciprocal(z, approx=True)
    else:
        acc = jnp.sum(x * jnp.log(x), axis=1, keepdims=True)
        ent = acc.reshape(o_ref.shape) * (-_INV_LN2)
    o_ref[...] = ent.astype(o_ref.dtype)


def _entropy_row_tiled(x, apply_softmax, budget_rows):
    N, C = x.shape
    q = _ROW_TILE_QUANTUM
    n_floor = (N // q) * q                 # keep block rows <= N (no oversized blocks)
    half = pl.cdiv(pl.cdiv(N, 2), q) * q   # cap so grid >= 2 when possible (v7x: 2 TCs)
    tile_n = max(q, min(budget_rows, n_floor, half))
    grid_n = pl.cdiv(N, tile_n)            # no jnp.pad: last tile reads OOB garbage rows;
                                           # those rows' outputs are sliced off below.
    out = pl.pallas_call(
        functools.partial(_row_tiled_kernel, apply_softmax=apply_softmax),
        out_shape=jax.ShapeDtypeStruct((grid_n * tile_n // _LANE, _LANE), x.dtype),
        grid=(grid_n,),
        in_specs=[pl.BlockSpec((tile_n, C), lambda i: (i, 0))],
        out_specs=pl.BlockSpec((tile_n // _LANE, _LANE), lambda i: (i, 0)),
        compiler_params=pltpu.CompilerParams(
            dimension_semantics=("parallel",),
            vmem_limit_bytes=_VMEM_LIMIT,
        ),
    )(x)
    return out.reshape(-1)[:N]


# ----------------------------------------------------------------------------
# Wide rows: tile the class axis with online-softmax accumulators in VMEM.
# ----------------------------------------------------------------------------
def _class_tiled_softmax_kernel(x_ref, o_ref, m_acc, z_acc, se_acc,
                                *, n_classes, tile_c, need_mask):
    c = pl.program_id(1)
    x = x_ref[...].astype(jnp.float32)
    if need_mask:
        col = jax.lax.broadcasted_iota(jnp.int32, x.shape, 1) + c * tile_c
        valid = col < n_classes
        x = jnp.where(valid, x, -jnp.inf)

    # Per-chunk statistics relative to the chunk max.
    m_b = jnp.max(x, axis=1, keepdims=True)
    s = x - m_b
    e = jnp.exp(s)
    es = e * s
    if need_mask:
        es = jnp.where(valid, es, 0.0)     # avoid 0 * (-inf) = NaN on masked cols
    z_b = jnp.sum(e, axis=1, keepdims=True)
    se_b = jnp.sum(es, axis=1, keepdims=True)

    @pl.when(c == 0)
    def _():
        m_acc[...] = m_b
        z_acc[...] = z_b
        se_acc[...] = se_b

    @pl.when(c > 0)
    def _():
        m_prev, z_prev, se_prev = m_acc[...], z_acc[...], se_acc[...]
        m_new = jnp.maximum(m_prev, m_b)
        a = jnp.exp(m_prev - m_new)
        b = jnp.exp(m_b - m_new)
        z_acc[...] = a * z_prev + b * z_b
        se_acc[...] = (a * (se_prev + (m_prev - m_new) * z_prev)
                       + b * (se_b + (m_b - m_new) * z_b))
        m_acc[...] = m_new

    @pl.when(c == pl.num_programs(1) - 1)
    def _():
        z = z_acc[...]
        ent = jnp.log(z) - se_acc[...] * pl.reciprocal(z, approx=True)
        o_ref[...] = ent.astype(o_ref.dtype)


def _class_tiled_raw_kernel(x_ref, o_ref, acc, *, n_classes, tile_c, need_mask):
    c = pl.program_id(1)

    @pl.when(c == 0)
    def _():
        acc[...] = jnp.zeros_like(acc)

    x = x_ref[...].astype(jnp.float32)
    xlx = x * jnp.log(x)
    if need_mask:
        col = jax.lax.broadcasted_iota(jnp.int32, x.shape, 1) + c * tile_c
        xlx = jnp.where(col < n_classes, xlx, 0.0)
    acc[...] += jnp.sum(xlx, axis=1, keepdims=True)

    @pl.when(c == pl.num_programs(1) - 1)
    def _():
        o_ref[...] = (acc[...] * (-_INV_LN2)).astype(o_ref.dtype)


def _entropy_class_tiled(x, apply_softmax):
    N, C = x.shape
    itemsize = jnp.dtype(x.dtype).itemsize
    # Small row tile (class axis carries the bandwidth); 256 is a multiple of the
    # sublane pack for f32/bf16/int8. Use the full N when it is smaller.
    tile_n = N if N <= 256 else 256
    tile_c = (_MAX_BLOCK_BYTES // max(tile_n * itemsize, 1)) // _LANE * _LANE
    tile_c = max(tile_c, _LANE)
    if tile_c >= C:
        tile_c = C
    need_mask = (C % tile_c) != 0
    grid = (pl.cdiv(N, tile_n), pl.cdiv(C, tile_c))  # reduction (C) axis last

    if apply_softmax:
        kernel = functools.partial(_class_tiled_softmax_kernel,
                                   n_classes=C, tile_c=tile_c, need_mask=need_mask)
        scratch = [pltpu.VMEM((tile_n, 1), jnp.float32)] * 3
    else:
        kernel = functools.partial(_class_tiled_raw_kernel,
                                   n_classes=C, tile_c=tile_c, need_mask=need_mask)
        scratch = [pltpu.VMEM((tile_n, 1), jnp.float32)]

    out = pl.pallas_call(
        kernel,
        out_shape=jax.ShapeDtypeStruct((N, 1), x.dtype),
        grid=grid,
        in_specs=[pl.BlockSpec((tile_n, tile_c), lambda i, j: (i, j))],
        out_specs=pl.BlockSpec((tile_n, 1), lambda i, j: (i, 0)),
        scratch_shapes=scratch,
        compiler_params=pltpu.CompilerParams(
            dimension_semantics=("parallel", "arbitrary"),
            vmem_limit_bytes=_VMEM_LIMIT,
        ),
    )(x)
    return out[:, 0]


# ----------------------------------------------------------------------------
# Public entry point.
# ----------------------------------------------------------------------------
def entropy_loss(x, apply_softmax=True):
    """Pallas port of EntropyLoss.forward(x, applySoftMax). x: [N, C] -> [N]."""
    N, C = x.shape
    itemsize = jnp.dtype(x.dtype).itemsize
    row_bytes = C * itemsize
    budget_rows = ((_MAX_BLOCK_BYTES // max(row_bytes, 1))
                   // _ROW_TILE_QUANTUM * _ROW_TILE_QUANTUM)

    if N >= _ROW_TILE_QUANTUM and budget_rows >= _ROW_TILE_QUANTUM:
        return _entropy_row_tiled(x, apply_softmax, budget_rows)
    if N * row_bytes <= _MAX_BLOCK_BYTES:
        return _entropy_small(x, apply_softmax)
    # Wide rows (large C): online-softmax class tiling keeps blocks bounded on
    # every generation, including v7x's 64 MiB VMEM.
    return _entropy_class_tiled(x, apply_softmax)


if __name__ == "__main__":
    key = jax.random.PRNGKey(0)
    k1, k2, k3 = jax.random.split(key, 3)

    def ref_softmax_entropy(x):
        xf = x.astype(jnp.float32)
        return -jnp.sum(jax.nn.softmax(xf, axis=1) * jax.nn.log_softmax(xf, axis=1), axis=1)

    def ref_raw_entropy(x):
        xf = x.astype(jnp.float32)
        return -jnp.sum(xf * jnp.log2(xf), axis=1)

    tol = dict(atol=5e-3, rtol=5e-3)  # approx reciprocal on the EUP path

    # 1) Small logits [batch=8, classes=32] -> single-block path.
    x1 = jax.random.normal(k1, (8, 32), dtype=jnp.float32)
    ent1 = jax.block_until_ready(entropy_loss(x1, apply_softmax=True))
    assert ent1.shape == (8,) and ent1.dtype == x1.dtype
    assert jnp.allclose(ent1, ref_softmax_entropy(x1), **tol)
    p1 = jax.nn.softmax(x1, axis=1)
    ent1b = jax.block_until_ready(entropy_loss(p1, apply_softmax=False))
    assert jnp.allclose(ent1b, ref_raw_entropy(p1), **tol)

    # 2) [2500, 128] -> row-tiled lane-dense path (partial last tile, no pad).
    x2 = jax.random.normal(k2, (2500, 128), dtype=jnp.float32) * 3.0
    ent2 = jax.block_until_ready(entropy_loss(x2, apply_softmax=True))
    assert ent2.shape == (2500,)
    assert jnp.allclose(ent2, ref_softmax_entropy(x2), **tol)
    p2 = jax.nn.softmax(x2, axis=1)
    ent2b = jax.block_until_ready(entropy_loss(p2, apply_softmax=False))
    assert jnp.allclose(ent2b, ref_raw_entropy(p2), **tol)

    # 3) Wide rows [300, 5000] -> class-tiled online-softmax path (masked C tail).
    x3 = jax.random.normal(k3, (300, 5000), dtype=jnp.float32)
    ent3 = jax.block_until_ready(entropy_loss(x3, apply_softmax=True))
    assert ent3.shape == (300,)
    assert jnp.allclose(ent3, ref_softmax_entropy(x3), **tol)
    p3 = jax.nn.softmax(x3, axis=1)
    ent3b = jax.block_until_ready(entropy_loss(p3, apply_softmax=False))
    assert jnp.allclose(ent3b, ref_raw_entropy(p3), **tol)

    print("KERNEL_OK")
</pallas_src>

<mosaic_0001>
module attributes {stable_mosaic.version = 11 : i64} {
  func.func @_small_kernel(%arg0: memref<8x32xf32, #tpu.memory_space<vmem>>, %arg1: memref<8x1xf32, #tpu.memory_space<vmem>>) attributes {dimension_semantics = [], scalar_prefetch = 0 : i64, scratch_operands = 0 : i64, tpu.core_type = #tpu.core_type<tc>} {
    %c0 = arith.constant 0 : index
    %c0_0 = arith.constant 0 : index
    %0 = vector.load %arg0[%c0, %c0_0] : memref<8x32xf32, #tpu.memory_space<vmem>>, vector<8x32xf32>
    %cst = arith.constant dense<0xFF800000> : vector<8xf32>
    %1 = vector.multi_reduction <maximumf>, %0, %cst [1] : vector<8x32xf32> to vector<8xf32>
    %2 = vector.shape_cast %1 : vector<8xf32> to vector<8x1xf32>
    %3 = vector.broadcast %2 : vector<8x1xf32> to vector<8x32xf32>
    %4 = arith.subf %0, %3 : vector<8x32xf32>
    %5 = math.exp %4 : vector<8x32xf32>
    %cst_1 = arith.constant dense<0.000000e+00> : vector<8xf32>
    %6 = vector.multi_reduction <add>, %5, %cst_1 [1] : vector<8x32xf32> to vector<8xf32>
    %7 = vector.shape_cast %6 : vector<8xf32> to vector<8x1xf32>
    %8 = arith.mulf %5, %4 : vector<8x32xf32>
    %cst_2 = arith.constant dense<0.000000e+00> : vector<8xf32>
    %9 = vector.multi_reduction <add>, %8, %cst_2 [1] : vector<8x32xf32> to vector<8xf32>
    %10 = vector.shape_cast %9 : vector<8xf32> to vector<8x1xf32>
    %11 = math.log %7 : vector<8x1xf32>
    %12 = tpu.reciprocal %7 {approx = true} : vector<8x1xf32> -> vector<8x1xf32>
    %13 = arith.mulf %10, %12 : vector<8x1xf32>
    %14 = arith.subf %11, %13 : vector<8x1xf32>
    %c0_3 = arith.constant 0 : index
    %c0_4 = arith.constant 0 : index
    %15 = vector.load %arg1[%c0_3, %c0_4] : memref<8x1xf32, #tpu.memory_space<vmem>>, vector<8x1xf32>
    tpu.vector_store %arg1[%c0_3, %c0_4], %14 {strides = array<i32>} : memref<8x1xf32, #tpu.memory_space<vmem>>, vector<8x1xf32>,
    return
  }
}

</mosaic_0001>

<llo_original>
// kernel: tpu_custom_call.1
$region0: #{tpu_custom_call.1}
  #allocation0 [shape = 'u32[]', space=smem, size = 0x4, offset = 0x4, fixed_abs, tag = 'smem constant byte address 0x4 - core index']
  #allocation1 [shape = 'u32[144,128]{1,0:T(1,128)}', space=vmem, size = 0x12000, scoped, tag = 'internal scratch']
  %s0 = inlined_call_operand.hbm [shape: f32[8,32], index: 0, kind: input, shape index: {}]
  %s1 = inlined_call_operand.vmem [shape: f32[8,1], index: 1, kind: output, shape index: {}]
  %s2 = sld [smem:[#allocation0]]
  $region18: #{tpu_custom_call.1} parent=0
    _
  %s4 = ssub.s32 1, %s2
  %s5 = scalar_select 0, %s4, %s2
  $region1: #{tpu_custom_call.1} parent=0
    #allocation2 [shape = 'u8[4096]{0}', space=vmem, size = 0x1000, scoped, tag = 'input window, operand 0, single buffered']
    #allocation3 [shape = 's32[1]{0}', space=sflag, size = 0x4, scoped, tag = 'scoped memory for tpu_custom_call.1']
    %6 = vsyncpa [#allocation3], 0
    // Predicated region
    $region2: #{tpu_custom_call.1} parent=1 // pred_check
      _
    $region3: #{tpu_custom_call.1} parent=1 // pred_check_branch
      %8 = sbr.rel (0) target = $region5
    $region4: #{tpu_custom_call.1} parent=1 // pred_region
      %s10 = ssub.s32 128, 128
      %11 = vsyncadd [#allocation3], %s10
      %s13 = sshll.u32 [#allocation2], 4
      %s14 = int_to_ptr.vmem [resolvable:$true] %s13
      %16 = dma.hbm_to_vmem [thread:$0]  %s0, 128, %s14, [#allocation3]
    $region5: #{tpu_custom_call.1} parent=1 // pred_fallthru
      _
    // Predicated region
    $region6: #{tpu_custom_call.1} parent=1 // pred_check
      _
    $region7: #{tpu_custom_call.1} parent=1 // pred_check_branch
      %18 = sbr.rel (0) target = $region9
    $region8: #{tpu_custom_call.1} parent=1 // pred_region
      %19 = dma.done [#allocation3], 128
    $region9: #{tpu_custom_call.1} parent=1 // pred_fallthru
      _
    %v20 = vld [vmem:[#allocation2] sm:$0xff]
    %vm21 = vcmask 261120
    %v22 = vsel %vm21, %v20, -inf
    %23 = vmax.xlane.f32.xlu0 %v22
    %v24 = vpop.xlane.xlu0 %23
    %v25 = vsub.f32 %v20, %v24
    %v26 = vmul.f32 %v25, 1.442695
    %v27 = vpow.pop %v26
    %v28 = vsel %vm21, %v27, 0.0
    %29 = vadd.xlane.f32.xlu0 %v28
    %v30 = vpop.xlane.xlu0 %29
    %v31 = vmul.f32 %v27, %v25
    %v32 = vsel %vm21, %v31, 0.0
    %33 = vadd.xlane.f32.xlu0 %v32
    %v34 = vpop.xlane.xlu0 %33
    %v35 = vlog2.pop %v30
    %v36 = vmul.f32 %v35, 0.6931472
    %v37 = vrcp.pop %v30
    %v38 = vmul.f32 %v34, %v37
    %v39 = vsub.f32 %v36, %v38
    %vm40 = vcmask 7168
    %41 = vst.msk [vmem:[%s1] sm:$0xff] %vm40, %v39
    // Predicated region
    $region10: #{tpu_custom_call.1} parent=1 // pred_check
      _
    $region11: #{tpu_custom_call.1} parent=1 // pred_check_branch
      %43 = sbr.rel (0) target = $region13
    $region12: #{tpu_custom_call.1} parent=1 // pred_region
      _
    $region13: #{tpu_custom_call.1} parent=1 // pred_fallthru
      _
    // Predicated region
    $region14: #{tpu_custom_call.1} parent=1 // pred_check
      _
    $region15: #{tpu_custom_call.1} parent=1 // pred_check_branch
      %45 = sbr.rel (0) target = $region17
    $region16: #{tpu_custom_call.1} parent=1 // pred_region
      _
    $region17: #{tpu_custom_call.1} parent=1 // pred_fallthru
      _
    %46 = vsyncpa [#allocation3], 1

</llo_original>
